<compile_context>
chip_gen: v5e
topology: v5e:2x2
jax: 0.10.0
libtpu: 0.0.40
codegen_flags: <defaults>
</compile_context>

<pallas_src>
import jax
import jax.numpy as jnp
from jax.experimental import pallas as pl
from jax.experimental.pallas import tpu as pltpu


# ---------------------------------------------------------------------------
# Kernel 1: hoisted input projection
#   gx[row, :] = x[row, :] @ W_ih^T + (b_ih + b_hh)     for all T*B rows
# ---------------------------------------------------------------------------
def input_proj_kernel(x_ref, w_ref, b_ref, out_ref):
    # x_ref: (TM, D) bf16, w_ref: (D, 4H) bf16, b_ref: (1, 4H) f32
    out_ref[...] = (
        jnp.dot(x_ref[...], w_ref[...], preferred_element_type=jnp.float32)
        + b_ref[...]
    )


# ---------------------------------------------------------------------------
# Kernel 2: sequential LSTM recurrence (chunked over time) + final linear head
# ---------------------------------------------------------------------------
def lstm_recurrent_kernel(gx_ref, whh_ref, wfc_ref, bfc_ref, out_ref,
                          h_ref, c_ref):
    # gx_ref : (TT, B, 4H) f32   precomputed x-projection (+ bias) for TT steps
    # whh_ref: (H, 4H)    bf16   hidden->gates weights (pre-transposed)
    # wfc_ref: (H, Cp)    f32    final linear weights (pre-transposed, padded)
    # bfc_ref: (1, Cp)    f32    final linear bias (padded)
    # out_ref: (B, Cp)    f32    logits, written on the last time chunk only
    # h_ref/c_ref: (B, H) f32    VMEM scratch carrying the recurrent state
    tc = pl.program_id(0)
    n_chunks = pl.num_programs(0)
    TT = gx_ref.shape[0]
    H = h_ref.shape[-1]

    @pl.when(tc == 0)
    def _init():
        h_ref[...] = jnp.zeros_like(h_ref)
        c_ref[...] = jnp.zeros_like(c_ref)

    whh = whh_ref[...]  # hoisted load; loop-invariant across timesteps

    def step(tt, carry):
        h, c = carry
        # Only the h @ W_hh matmul remains inside the recurrence (bf16 MXU
        # operands, f32 accumulation; state stays f32).
        gates = gx_ref[tt] + jnp.dot(
            h.astype(jnp.bfloat16), whh, preferred_element_type=jnp.float32)
        # PyTorch gate order [i, f, g, o].  For H % 128 == 0 these slices are
        # lane-group aligned; for small H the per-step slicing cost is tiny
        # (sigmoid/tanh run on the EUP, off the VALU critical slot).
        i = jax.nn.sigmoid(gates[:, 0:H])
        f = jax.nn.sigmoid(gates[:, H:2 * H])
        g = jnp.tanh(gates[:, 2 * H:3 * H])
        o = jax.nn.sigmoid(gates[:, 3 * H:4 * H])
        c = f * c + i * g
        h = o * jnp.tanh(c)
        return (h, c)

    h, c = jax.lax.fori_loop(0, TT, step, (h_ref[...], c_ref[...]),
                             unroll=True)
    h_ref[...] = h
    c_ref[...] = c

    @pl.when(tc == n_chunks - 1)
    def _finalize():
        logits = (jnp.dot(h, wfc_ref[...], preferred_element_type=jnp.float32)
                  + bfc_ref[...])
        out_ref[...] = logits.astype(out_ref.dtype)


def _largest_divisor_leq(n, cap):
    for cand in range(max(1, min(n, cap)), 0, -1):
        if n % cand == 0:
            return cand
    return 1


def lstm_classifier(x, params, *, time_chunk_cap=32, row_block_cap=512):
    """x: (B, T, input_size) float32 (batch_first, PyTorch convention)."""
    B, T, D = x.shape
    w_ih, w_hh, b_ih, b_hh, w_fc, b_fc = (
        params["w_ih"], params["w_hh"], params["b_ih"], params["b_hh"],
        params["w_fc"], params["b_fc"])
    H = w_hh.shape[1]
    G = 4 * H
    C = w_fc.shape[0]
    out_dtype = x.dtype

    # ---- one-time layout prep (outside the recurrence) -------------------
    Bp = max(8, ((B + 7) // 8) * 8)            # sublane-aligned batch
    if Bp != B:
        x = jnp.pad(x, ((0, Bp - B), (0, 0), (0, 0)))
    Cp = max(128, ((C + 127) // 128) * 128)    # lane-dense classifier output

    x_tm = jnp.transpose(x, (1, 0, 2))                         # (T, Bp, D)
    x2d = x_tm.reshape(T * Bp, D).astype(jnp.bfloat16)         # (T*Bp, D)
    wih_t = jnp.transpose(w_ih, (1, 0)).astype(jnp.bfloat16)   # (D, 4H)
    whh_t = jnp.transpose(w_hh, (1, 0)).astype(jnp.bfloat16)   # (H, 4H)
    b = (b_ih + b_hh).astype(jnp.float32).reshape(1, G)        # (1, 4H)
    wfc_t = jnp.pad(jnp.transpose(w_fc, (1, 0)).astype(jnp.float32),
                    ((0, 0), (0, Cp - C)))                     # (H, Cp)
    bfc = jnp.pad(b_fc.astype(jnp.float32).reshape(1, C),
                  ((0, 0), (0, Cp - C)))                       # (1, Cp)

    # ---- stage 1: hoisted input projection (one big parallel matmul) -----
    # Row block = (timesteps-per-block * Bp): always a multiple of 8 and an
    # exact divisor of T*Bp, so every block is full (no masked boundary vst).
    TB = T * Bp
    t_rows = _largest_divisor_leq(T, max(1, row_block_cap // Bp))
    TM = t_rows * Bp
    gx2d = pl.pallas_call(
        input_proj_kernel,
        out_shape=jax.ShapeDtypeStruct((TB, G), jnp.float32),
        grid_spec=pltpu.PrefetchScalarGridSpec(
            num_scalar_prefetch=0,
            grid=(TB // TM,),
            in_specs=[
                pl.BlockSpec((TM, D), lambda r: (r, 0)),       # x rows
                pl.BlockSpec((D, G), lambda r: (0, 0)),        # W_ih^T
                pl.BlockSpec((1, G), lambda r: (0, 0)),        # folded bias
            ],
            out_specs=pl.BlockSpec((TM, G), lambda r: (r, 0)),
        ),
        compiler_params=pltpu.CompilerParams(
            dimension_semantics=("parallel",)),
    )(x2d, wih_t, b)
    gx = gx2d.reshape(T, Bp, G)   # contiguous reshape, time-major

    # ---- stage 2: sequential recurrence, coarsened over time chunks ------
    TT = _largest_divisor_leq(T, time_chunk_cap)
    out = pl.pallas_call(
        lstm_recurrent_kernel,
        out_shape=jax.ShapeDtypeStruct((Bp, Cp), jnp.float32),
        grid_spec=pltpu.PrefetchScalarGridSpec(
            num_scalar_prefetch=0,
            grid=(T // TT,),
            in_specs=[
                pl.BlockSpec((TT, Bp, G), lambda t: (t, 0, 0)),  # gx chunk
                pl.BlockSpec((H, G), lambda t: (0, 0)),          # W_hh^T
                pl.BlockSpec((H, Cp), lambda t: (0, 0)),         # W_fc^T
                pl.BlockSpec((1, Cp), lambda t: (0, 0)),         # b_fc
            ],
            out_specs=pl.BlockSpec((Bp, Cp), lambda t: (0, 0)),
            scratch_shapes=[
                pltpu.VMEM((Bp, H), jnp.float32),   # h state
                pltpu.VMEM((Bp, H), jnp.float32),   # c state
            ],
        ),
        compiler_params=pltpu.CompilerParams(
            dimension_semantics=("arbitrary",),   # recurrence: sequential
        ),
    )(gx, whh_t, wfc_t, bfc)

    return out[:B, :C].astype(out_dtype)


def lstm_classifier_ref(x, params):
    """Pure-JAX f32 reference with identical PyTorch LSTM semantics."""
    w_ih, w_hh, b_ih, b_hh, w_fc, b_fc = (
        params["w_ih"], params["w_hh"], params["b_ih"], params["b_hh"],
        params["w_fc"], params["b_fc"])
    B, T, D = x.shape
    H = w_hh.shape[1]

    def step(carry, x_t):
        h, c = carry
        gates = x_t @ w_ih.T + b_ih + h @ w_hh.T + b_hh
        i = jax.nn.sigmoid(gates[:, 0:H])
        f = jax.nn.sigmoid(gates[:, H:2 * H])
        g = jnp.tanh(gates[:, 2 * H:3 * H])
        o = jax.nn.sigmoid(gates[:, 3 * H:4 * H])
        c = f * c + i * g
        h = o * jnp.tanh(c)
        return (h, c), None

    h0 = jnp.zeros((B, H), jnp.float32)
    c0 = jnp.zeros((B, H), jnp.float32)
    (h_last, _), _ = jax.lax.scan(step, (h0, c0), jnp.transpose(x, (1, 0, 2)))
    return h_last @ w_fc.T + b_fc


def init_params(key, input_size, hidden_size, num_classes):
    ks = jax.random.split(key, 6)
    s = 1.0 / jnp.sqrt(hidden_size)
    return {
        "w_ih": jax.random.uniform(ks[0], (4 * hidden_size, input_size),
                                   jnp.float32, -s, s),
        "w_hh": jax.random.uniform(ks[1], (4 * hidden_size, hidden_size),
                                   jnp.float32, -s, s),
        "b_ih": jax.random.uniform(ks[2], (4 * hidden_size,), jnp.float32, -s, s),
        "b_hh": jax.random.uniform(ks[3], (4 * hidden_size,), jnp.float32, -s, s),
        "w_fc": jax.random.uniform(ks[4], (num_classes, hidden_size),
                                   jnp.float32, -s, s),
        "b_fc": jax.random.uniform(ks[5], (num_classes,), jnp.float32, -s, s),
    }


if __name__ == "__main__":
    batch, seq, input_size, hidden_size, num_classes = 4, 8, 16, 32, 5

    key = jax.random.PRNGKey(0)
    k_x, k_p = jax.random.split(key)
    x = jax.random.normal(k_x, (batch, seq, input_size), jnp.float32)
    params = init_params(k_p, input_size, hidden_size, num_classes)

    out = jax.jit(lstm_classifier)(x, params)
    out = jax.block_until_ready(out)

    ref = lstm_classifier_ref(x, params)
    assert out.shape == (batch, num_classes)
    # bf16 MXU operands (x, W_ih, W_hh) are intentional; state/accumulation
    # stay f32, so compare against the f32 reference with bf16-level tolerance.
    assert jnp.allclose(out, ref, atol=5e-2, rtol=5e-2), "mismatch vs reference"

    print("KERNEL_OK")
</pallas_src>

<mosaic_0001>
module attributes {stable_mosaic.version = 11 : i64} {
  func.func @input_proj_kernel(%arg0: i32, %arg1: memref<64x16xbf16, #tpu.memory_space<vmem>>, %arg2: memref<16x128xbf16, #tpu.memory_space<vmem>>, %arg3: memref<1x128xf32, #tpu.memory_space<vmem>>, %arg4: memref<64x128xf32, #tpu.memory_space<vmem>>) attributes {dimension_semantics = [#tpu.dimension_semantics<parallel>], iteration_bounds = array<i64: 1>, scalar_prefetch = 0 : i64, scratch_operands = 0 : i64, tpu.core_type = #tpu.core_type<tc>, window_params = [{transform_indices = @transform_0, window_bounds = array<i64: 64, 16>}, {pipeline_mode = #tpu.pipeline_mode<synchronous>, transform_indices = @transform_1, window_bounds = array<i64: 16, 128>}, {pipeline_mode = #tpu.pipeline_mode<synchronous>, transform_indices = @transform_2, window_bounds = array<i64: 1, 128>}, {transform_indices = @transform_3, window_bounds = array<i64: 64, 128>}]} {
    %c0 = arith.constant 0 : index
    %c0_0 = arith.constant 0 : index
    %0 = vector.load %arg1[%c0, %c0_0] : memref<64x16xbf16, #tpu.memory_space<vmem>>, vector<64x16xbf16>
    %c0_1 = arith.constant 0 : index
    %c0_2 = arith.constant 0 : index
    %1 = vector.load %arg2[%c0_1, %c0_2] : memref<16x128xbf16, #tpu.memory_space<vmem>>, vector<16x128xbf16>
    %cst = arith.constant dense<0.000000e+00> : vector<64x128xf32>
    %2 = tpu.matmul %0, %1, %cst {dimension_numbers = #tpu.dot_dimension_numbers<[1], [0], [0], [1], [0, 0, 1, 1], [], []>} : vector<64x16xbf16>, vector<16x128xbf16>, vector<64x128xf32> -> vector<64x128xf32>
    %c0_3 = arith.constant 0 : index
    %c0_4 = arith.constant 0 : index
    %3 = vector.load %arg3[%c0_3, %c0_4] : memref<1x128xf32, #tpu.memory_space<vmem>>, vector<1x128xf32>
    %4 = vector.broadcast %3 : vector<1x128xf32> to vector<64x128xf32>
    %5 = arith.addf %2, %4 : vector<64x128xf32>
    %c0_5 = arith.constant 0 : index
    %c0_6 = arith.constant 0 : index
    %6 = vector.load %arg4[%c0_5, %c0_6] : memref<64x128xf32, #tpu.memory_space<vmem>>, vector<64x128xf32>
    tpu.vector_store %arg4[%c0_5, %c0_6], %5 {strides = array<i32>} : memref<64x128xf32, #tpu.memory_space<vmem>>, vector<64x128xf32>,
    return
  }
  func.func @transform_0(%arg0: i32) -> (i32, i32) {
    %c0_i32 = arith.constant 0 : i32
    %c0_i32_0 = arith.constant 0 : i32
    return %arg0, %c0_i32 : i32, i32
  }
  func.func @transform_1(%arg0: i32) -> (i32, i32) {
    %c0_i32 = arith.constant 0 : i32
    %c0_i32_0 = arith.constant 0 : i32
    %c0_i32_1 = arith.constant 0 : i32
    return %c0_i32, %c0_i32_0 : i32, i32
  }
  func.func @transform_2(%arg0: i32) -> (i32, i32) {
    %c0_i32 = arith.constant 0 : i32
    %c0_i32_0 = arith.constant 0 : i32
    %c0_i32_1 = arith.constant 0 : i32
    return %c0_i32, %c0_i32_0 : i32, i32
  }
  func.func @transform_3(%arg0: i32) -> (i32, i32) {
    %c0_i32 = arith.constant 0 : i32
    %c0_i32_0 = arith.constant 0 : i32
    return %arg0, %c0_i32 : i32, i32
  }
}

module attributes {stable_mosaic.version = 11 : i64} {
  func.func @lstm_recurrent_kernel(%arg0: i32, %arg1: memref<8x8x128xf32, #tpu.memory_space<vmem>>, %arg2: memref<32x128xbf16, #tpu.memory_space<vmem>>, %arg3: memref<32x128xf32, #tpu.memory_space<vmem>>, %arg4: memref<1x128xf32, #tpu.memory_space<vmem>>, %arg5: memref<8x128xf32, #tpu.memory_space<vmem>>, %arg6: memref<8x32xf32, #tpu.memory_space<vmem>>, %arg7: memref<8x32xf32, #tpu.memory_space<vmem>>) attributes {dimension_semantics = [#tpu.dimension_semantics<arbitrary>], iteration_bounds = array<i64: 1>, scalar_prefetch = 0 : i64, scratch_operands = 2 : i64, tpu.core_type = #tpu.core_type<tc>, window_params = [{transform_indices = @transform_0, window_bounds = array<i64: 8, 8, 128>}, {pipeline_mode = #tpu.pipeline_mode<synchronous>, transform_indices = @transform_1, window_bounds = array<i64: 32, 128>}, {pipeline_mode = #tpu.pipeline_mode<synchronous>, transform_indices = @transform_2, window_bounds = array<i64: 32, 128>}, {pipeline_mode = #tpu.pipeline_mode<synchronous>, transform_indices = @transform_3, window_bounds = array<i64: 1, 128>}, {pipeline_mode = #tpu.pipeline_mode<synchronous>, transform_indices = @transform_4, window_bounds = array<i64: 8, 128>}]} {
    %c0_i32 = arith.constant 0 : i32
    %0 = arith.cmpi eq, %arg0, %c0_i32 : i32
    %1 = arith.extui %0 : i1 to i32
    %c0_i32_0 = arith.constant 0 : i32
    %2 = arith.cmpi ne, %1, %c0_i32_0 : i32
    scf.if %2 {
      %cst_60 = arith.constant 0.000000e+00 : f32
      %259 = vector.broadcast %cst_60 : f32 to vector<8x32xf32>
      %c0_61 = arith.constant 0 : index
      %c0_62 = arith.constant 0 : index
      %260 = vector.load %arg6[%c0_61, %c0_62] : memref<8x32xf32, #tpu.memory_space<vmem>>, vector<8x32xf32>
      tpu.vector_store %arg6[%c0_61, %c0_62], %259 {strides = array<i32>} : memref<8x32xf32, #tpu.memory_space<vmem>>, vector<8x32xf32>,
      %cst_63 = arith.constant 0.000000e+00 : f32
      %261 = vector.broadcast %cst_63 : f32 to vector<8x32xf32>
      %c0_64 = arith.constant 0 : index
      %c0_65 = arith.constant 0 : index
      %262 = vector.load %arg7[%c0_64, %c0_65] : memref<8x32xf32, #tpu.memory_space<vmem>>, vector<8x32xf32>
      tpu.vector_store %arg7[%c0_64, %c0_65], %261 {strides = array<i32>} : memref<8x32xf32, #tpu.memory_space<vmem>>, vector<8x32xf32>,
    } else {
    }
    %c0 = arith.constant 0 : index
    %c0_1 = arith.constant 0 : index
    %3 = vector.load %arg2[%c0, %c0_1] : memref<32x128xbf16, #tpu.memory_space<vmem>>, vector<32x128xbf16>
    %c0_2 = arith.constant 0 : index
    %c0_3 = arith.constant 0 : index
    %4 = vector.load %arg6[%c0_2, %c0_3] : memref<8x32xf32, #tpu.memory_space<vmem>>, vector<8x32xf32>
    %c0_4 = arith.constant 0 : index
    %c0_5 = arith.constant 0 : index
    %5 = vector.load %arg7[%c0_4, %c0_5] : memref<8x32xf32, #tpu.memory_space<vmem>>, vector<8x32xf32>
    %c0_i32_6 = arith.constant 0 : i32
    %6 = arith.index_cast %c0_i32_6 : i32 to index
    %c0_7 = arith.constant 0 : index
    %c0_8 = arith.constant 0 : index
    %7 = vector.load %arg1[%6, %c0_7, %c0_8] : memref<8x8x128xf32, #tpu.memory_space<vmem>>, vector<1x8x128xf32>
    %8 = vector.shape_cast %7 : vector<1x8x128xf32> to vector<8x128xf32>
    %9 = arith.truncf %4 : vector<8x32xf32> to vector<8x32xbf16>
    %cst = arith.constant dense<0.000000e+00> : vector<8x128xf32>
    %10 = tpu.matmul %9, %3, %cst {dimension_numbers = #tpu.dot_dimension_numbers<[1], [0], [0], [1], [0, 0, 1, 1], [], []>} : vector<8x32xbf16>, vector<32x128xbf16>, vector<8x128xf32> -> vector<8x128xf32>
    %11 = arith.addf %8, %10 : vector<8x128xf32>
    %12 = vector.extract_strided_slice %11 {offsets = [0, 0], sizes = [8, 32], strides = [1, 1]} : vector<8x128xf32> to vector<8x32xf32>
    %13 = arith.negf %12 : vector<8x32xf32>
    %14 = math.exp %13 : vector<8x32xf32>
    %cst_9 = arith.constant 1.000000e+00 : f32
    %15 = vector.broadcast %cst_9 : f32 to vector<8x32xf32>
    %16 = arith.addf %15, %14 : vector<8x32xf32>
    %17 = arith.divf %15, %16 : vector<8x32xf32>
    %18 = vector.extract_strided_slice %11 {offsets = [0, 32], sizes = [8, 32], strides = [1, 1]} : vector<8x128xf32> to vector<8x32xf32>
    %19 = arith.negf %18 : vector<8x32xf32>
    %20 = math.exp %19 : vector<8x32xf32>
    %cst_10 = arith.constant 1.000000e+00 : f32
    %21 = vector.broadcast %cst_10 : f32 to vector<8x32xf32>
    %22 = arith.addf %21, %20 : vector<8x32xf32>
    %23 = arith.divf %21, %22 : vector<8x32xf32>
    %24 = vector.extract_strided_slice %11 {offsets = [0, 64], sizes = [8, 32], strides = [1, 1]} : vector<8x128xf32> to vector<8x32xf32>
    %25 = math.tanh %24 : vector<8x32xf32>
    %26 = vector.extract_strided_slice %11 {offsets = [0, 96], sizes = [8, 32], strides = [1, 1]} : vector<8x128xf32> to vector<8x32xf32>
    %27 = arith.negf %26 : vector<8x32xf32>
    %28 = math.exp %27 : vector<8x32xf32>
    %cst_11 = arith.constant 1.000000e+00 : f32
    %29 = vector.broadcast %cst_11 : f32 to vector<8x32xf32>
    %30 = arith.addf %29, %28 : vector<8x32xf32>
    %31 = arith.divf %29, %30 : vector<8x32xf32>
    %32 = arith.mulf %23, %5 : vector<8x32xf32>
    %33 = arith.mulf %17, %25 : vector<8x32xf32>
    %34 = arith.addf %32, %33 : vector<8x32xf32>
    %35 = math.tanh %34 : vector<8x32xf32>
    %36 = arith.mulf %31, %35 : vector<8x32xf32>
    %c1_i32 = arith.constant 1 : i32
    %37 = arith.index_cast %c1_i32 : i32 to index
    %c0_12 = arith.constant 0 : index
    %c0_13 = arith.constant 0 : index
    %38 = vector.load %arg1[%37, %c0_12, %c0_13] : memref<8x8x128xf32, #tpu.memory_space<vmem>>, vector<1x8x128xf32>
    %39 = vector.shape_cast %38 : vector<1x8x128xf32> to vector<8x128xf32>
    %40 = arith.truncf %36 : vector<8x32xf32> to vector<8x32xbf16>
    %cst_14 = arith.constant dense<0.000000e+00> : vector<8x128xf32>
    %41 = tpu.matmul %40, %3, %cst_14 {dimension_numbers = #tpu.dot_dimension_numbers<[1], [0], [0], [1], [0, 0, 1, 1], [], []>} : vector<8x32xbf16>, vector<32x128xbf16>, vector<8x128xf32> -> vector<8x128xf32>
    %42 = arith.addf %39, %41 : vector<8x128xf32>
    %43 = vector.extract_strided_slice %42 {offsets = [0, 0], sizes = [8, 32], strides = [1, 1]} : vector<8x128xf32> to vector<8x32xf32>
    %44 = arith.negf %43 : vector<8x32xf32>
    %45 = math.exp %44 : vector<8x32xf32>
    %cst_15 = arith.constant 1.000000e+00 : f32
    %46 = vector.broadcast %cst_15 : f32 to vector<8x32xf32>
    %47 = arith.addf %46, %45 : vector<8x32xf32>
    %48 = arith.divf %46, %47 : vector<8x32xf32>
    %49 = vector.extract_strided_slice %42 {offsets = [0, 32], sizes = [8, 32], strides = [1, 1]} : vector<8x128xf32> to vector<8x32xf32>
    %50 = arith.negf %49 : vector<8x32xf32>
    %51 = math.exp %50 : vector<8x32xf32>
    %cst_16 = arith.constant 1.000000e+00 : f32
    %52 = vector.broadcast %cst_16 : f32 to vector<8x32xf32>
    %53 = arith.addf %52, %51 : vector<8x32xf32>
    %54 = arith.divf %52, %53 : vector<8x32xf32>
    %55 = vector.extract_strided_slice %42 {offsets = [0, 64], sizes = [8, 32], strides = [1, 1]} : vector<8x128xf32> to vector<8x32xf32>
    %56 = math.tanh %55 : vector<8x32xf32>
    %57 = vector.extract_strided_slice %42 {offsets = [0, 96], sizes = [8, 32], strides = [1, 1]} : vector<8x128xf32> to vector<8x32xf32>
    %58 = arith.negf %57 : vector<8x32xf32>
    %59 = math.exp %58 : vector<8x32xf32>
    %cst_17 = arith.constant 1.000000e+00 : f32
    %60 = vector.broadcast %cst_17 : f32 to vector<8x32xf32>
    %61 = arith.addf %60, %59 : vector<8x32xf32>
    %62 = arith.divf %60, %61 : vector<8x32xf32>
    %63 = arith.mulf %54, %34 : vector<8x32xf32>
    %64 = arith.mulf %48, %56 : vector<8x32xf32>
    %65 = arith.addf %63, %64 : vector<8x32xf32>
    %66 = math.tanh %65 : vector<8x32xf32>
    %67 = arith.mulf %62, %66 : vector<8x32xf32>
    %c2_i32 = arith.constant 2 : i32
    %68 = arith.index_cast %c2_i32 : i32 to index
    %c0_18 = arith.constant 0 : index
    %c0_19 = arith.constant 0 : index
    %69 = vector.load %arg1[%68, %c0_18, %c0_19] : memref<8x8x128xf32, #tpu.memory_space<vmem>>, vector<1x8x128xf32>
    %70 = vector.shape_cast %69 : vector<1x8x128xf32> to vector<8x128xf32>
    %71 = arith.truncf %67 : vector<8x32xf32> to vector<8x32xbf16>
    %cst_20 = arith.constant dense<0.000000e+00> : vector<8x128xf32>
    %72 = tpu.matmul %71, %3, %cst_20 {dimension_numbers = #tpu.dot_dimension_numbers<[1], [0], [0], [1], [0, 0, 1, 1], [], []>} : vector<8x32xbf16>, vector<32x128xbf16>, vector<8x128xf32> -> vector<8x128xf32>
    %73 = arith.addf %70, %72 : vector<8x128xf32>
    %74 = vector.extract_strided_slice %73 {offsets = [0, 0], sizes = [8, 32], strides = [1, 1]} : vector<8x128xf32> to vector<8x32xf32>
    %75 = arith.negf %74 : vector<8x32xf32>
    %76 = math.exp %75 : vector<8x32xf32>
    %cst_21 = arith.constant 1.000000e+00 : f32
    %77 = vector.broadcast %cst_21 : f32 to vector<8x32xf32>
    %78 = arith.addf %77, %76 : vector<8x32xf32>
    %79 = arith.divf %77, %78 : vector<8x32xf32>
    %80 = vector.extract_strided_slice %73 {offsets = [0, 32], sizes = [8, 32], strides = [1, 1]} : vector<8x128xf32> to vector<8x32xf32>
    %81 = arith.negf %80 : vector<8x32xf32>
    %82 = math.exp %81 : vector<8x32xf32>
    %cst_22 = arith.constant 1.000000e+00 : f32
    %83 = vector.broadcast %cst_22 : f32 to vector<8x32xf32>
    %84 = arith.addf %83, %82 : vector<8x32xf32>
    %85 = arith.divf %83, %84 : vector<8x32xf32>
    %86 = vector.extract_strided_slice %73 {offsets = [0, 64], sizes = [8, 32], strides = [1, 1]} : vector<8x128xf32> to vector<8x32xf32>
    %87 = math.tanh %86 : vector<8x32xf32>
    %88 = vector.extract_strided_slice %73 {offsets = [0, 96], sizes = [8, 32], strides = [1, 1]} : vector<8x128xf32> to vector<8x32xf32>
    %89 = arith.negf %88 : vector<8x32xf32>
    %90 = math.exp %89 : vector<8x32xf32>
    %cst_23 = arith.constant 1.000000e+00 : f32
    %91 = vector.broadcast %cst_23 : f32 to vector<8x32xf32>
    %92 = arith.addf %91, %90 : vector<8x32xf32>
    %93 = arith.divf %91, %92 : vector<8x32xf32>
    %94 = arith.mulf %85, %65 : vector<8x32xf32>
    %95 = arith.mulf %79, %87 : vector<8x32xf32>
    %96 = arith.addf %94, %95 : vector<8x32xf32>
    %97 = math.tanh %96 : vector<8x32xf32>
    %98 = arith.mulf %93, %97 : vector<8x32xf32>
    %c3_i32 = arith.constant 3 : i32
    %99 = arith.index_cast %c3_i32 : i32 to index
    %c0_24 = arith.constant 0 : index
    %c0_25 = arith.constant 0 : index
    %100 = vector.load %arg1[%99, %c0_24, %c0_25] : memref<8x8x128xf32, #tpu.memory_space<vmem>>, vector<1x8x128xf32>
    %101 = vector.shape_cast %100 : vector<1x8x128xf32> to vector<8x128xf32>
    %102 = arith.truncf %98 : vector<8x32xf32> to vector<8x32xbf16>
    %cst_26 = arith.constant dense<0.000000e+00> : vector<8x128xf32>
    %103 = tpu.matmul %102, %3, %cst_26 {dimension_numbers = #tpu.dot_dimension_numbers<[1], [0], [0], [1], [0, 0, 1, 1], [], []>} : vector<8x32xbf16>, vector<32x128xbf16>, vector<8x128xf32> -> vector<8x128xf32>
    %104 = arith.addf %101, %103 : vector<8x128xf32>
    %105 = vector.extract_strided_slice %104 {offsets = [0, 0], sizes = [8, 32], strides = [1, 1]} : vector<8x128xf32> to vector<8x32xf32>
    %106 = arith.negf %105 : vector<8x32xf32>
    %107 = math.exp %106 : vector<8x32xf32>
    %cst_27 = arith.constant 1.000000e+00 : f32
    %108 = vector.broadcast %cst_27 : f32 to vector<8x32xf32>
    %109 = arith.addf %108, %107 : vector<8x32xf32>
    %110 = arith.divf %108, %109 : vector<8x32xf32>
    %111 = vector.extract_strided_slice %104 {offsets = [0, 32], sizes = [8, 32], strides = [1, 1]} : vector<8x128xf32> to vector<8x32xf32>
    %112 = arith.negf %111 : vector<8x32xf32>
    %113 = math.exp %112 : vector<8x32xf32>
    %cst_28 = arith.constant 1.000000e+00 : f32
    %114 = vector.broadcast %cst_28 : f32 to vector<8x32xf32>
    %115 = arith.addf %114, %113 : vector<8x32xf32>
    %116 = arith.divf %114, %115 : vector<8x32xf32>
    %117 = vector.extract_strided_slice %104 {offsets = [0, 64], sizes = [8, 32], strides = [1, 1]} : vector<8x128xf32> to vector<8x32xf32>
    %118 = math.tanh %117 : vector<8x32xf32>
    %119 = vector.extract_strided_slice %104 {offsets = [0, 96], sizes = [8, 32], strides = [1, 1]} : vector<8x128xf32> to vector<8x32xf32>
    %120 = arith.negf %119 : vector<8x32xf32>
    %121 = math.exp %120 : vector<8x32xf32>
    %cst_29 = arith.constant 1.000000e+00 : f32
    %122 = vector.broadcast %cst_29 : f32 to vector<8x32xf32>
    %123 = arith.addf %122, %121 : vector<8x32xf32>
    %124 = arith.divf %122, %123 : vector<8x32xf32>
    %125 = arith.mulf %116, %96 : vector<8x32xf32>
    %126 = arith.mulf %110, %118 : vector<8x32xf32>
    %127 = arith.addf %125, %126 : vector<8x32xf32>
    %128 = math.tanh %127 : vector<8x32xf32>
    %129 = arith.mulf %124, %128 : vector<8x32xf32>
    %c4_i32 = arith.constant 4 : i32
    %130 = arith.index_cast %c4_i32 : i32 to index
    %c0_30 = arith.constant 0 : index
    %c0_31 = arith.constant 0 : index
    %131 = vector.load %arg1[%130, %c0_30, %c0_31] : memref<8x8x128xf32, #tpu.memory_space<vmem>>, vector<1x8x128xf32>
    %132 = vector.shape_cast %131 : vector<1x8x128xf32> to vector<8x128xf32>
    %133 = arith.truncf %129 : vector<8x32xf32> to vector<8x32xbf16>
    %cst_32 = arith.constant dense<0.000000e+00> : vector<8x128xf32>
    %134 = tpu.matmul %133, %3, %cst_32 {dimension_numbers = #tpu.dot_dimension_numbers<[1], [0], [0], [1], [0, 0, 1, 1], [], []>} : vector<8x32xbf16>, vector<32x128xbf16>, vector<8x128xf32> -> vector<8x128xf32>
    %135 = arith.addf %132, %134 : vector<8x128xf32>
    %136 = vector.extract_strided_slice %135 {offsets = [0, 0], sizes = [8, 32], strides = [1, 1]} : vector<8x128xf32> to vector<8x32xf32>
    %137 = arith.negf %136 : vector<8x32xf32>
    %138 = math.exp %137 : vector<8x32xf32>
    %cst_33 = arith.constant 1.000000e+00 : f32
    %139 = vector.broadcast %cst_33 : f32 to vector<8x32xf32>
    %140 = arith.addf %139, %138 : vector<8x32xf32>
    %141 = arith.divf %139, %140 : vector<8x32xf32>
    %142 = vector.extract_strided_slice %135 {offsets = [0, 32], sizes = [8, 32], strides = [1, 1]} : vector<8x128xf32> to vector<8x32xf32>
    %143 = arith.negf %142 : vector<8x32xf32>
    %144 = math.exp %143 : vector<8x32xf32>
    %cst_34 = arith.constant 1.000000e+00 : f32
    %145 = vector.broadcast %cst_34 : f32 to vector<8x32xf32>
    %146 = arith.addf %145, %144 : vector<8x32xf32>
    %147 = arith.divf %145, %146 : vector<8x32xf32>
    %148 = vector.extract_strided_slice %135 {offsets = [0, 64], sizes = [8, 32], strides = [1, 1]} : vector<8x128xf32> to vector<8x32xf32>
    %149 = math.tanh %148 : vector<8x32xf32>
    %150 = vector.extract_strided_slice %135 {offsets = [0, 96], sizes = [8, 32], strides = [1, 1]} : vector<8x128xf32> to vector<8x32xf32>
    %151 = arith.negf %150 : vector<8x32xf32>
    %152 = math.exp %151 : vector<8x32xf32>
    %cst_35 = arith.constant 1.000000e+00 : f32
    %153 = vector.broadcast %cst_35 : f32 to vector<8x32xf32>
    %154 = arith.addf %153, %152 : vector<8x32xf32>
    %155 = arith.divf %153, %154 : vector<8x32xf32>
    %156 = arith.mulf %147, %127 : vector<8x32xf32>
    %157 = arith.mulf %141, %149 : vector<8x32xf32>
    %158 = arith.addf %156, %157 : vector<8x32xf32>
    %159 = math.tanh %158 : vector<8x32xf32>
    %160 = arith.mulf %155, %159 : vector<8x32xf32>
    %c5_i32 = arith.constant 5 : i32
    %161 = arith.index_cast %c5_i32 : i32 to index
    %c0_36 = arith.constant 0 : index
    %c0_37 = arith.constant 0 : index
    %162 = vector.load %arg1[%161, %c0_36, %c0_37] : memref<8x8x128xf32, #tpu.memory_space<vmem>>, vector<1x8x128xf32>
    %163 = vector.shape_cast %162 : vector<1x8x128xf32> to vector<8x128xf32>
    %164 = arith.truncf %160 : vector<8x32xf32> to vector<8x32xbf16>
    %cst_38 = arith.constant dense<0.000000e+00> : vector<8x128xf32>
    %165 = tpu.matmul %164, %3, %cst_38 {dimension_numbers = #tpu.dot_dimension_numbers<[1], [0], [0], [1], [0, 0, 1, 1], [], []>} : vector<8x32xbf16>, vector<32x128xbf16>, vector<8x128xf32> -> vector<8x128xf32>
    %166 = arith.addf %163, %165 : vector<8x128xf32>
    %167 = vector.extract_strided_slice %166 {offsets = [0, 0], sizes = [8, 32], strides = [1, 1]} : vector<8x128xf32> to vector<8x32xf32>
    %168 = arith.negf %167 : vector<8x32xf32>
    %169 = math.exp %168 : vector<8x32xf32>
    %cst_39 = arith.constant 1.000000e+00 : f32
    %170 = vector.broadcast %cst_39 : f32 to vector<8x32xf32>
    %171 = arith.addf %170, %169 : vector<8x32xf32>
    %172 = arith.divf %170, %171 : vector<8x32xf32>
    %173 = vector.extract_strided_slice %166 {offsets = [0, 32], sizes = [8, 32], strides = [1, 1]} : vector<8x128xf32> to vector<8x32xf32>
    %174 = arith.negf %173 : vector<8x32xf32>
    %175 = math.exp %174 : vector<8x32xf32>
    %cst_40 = arith.constant 1.000000e+00 : f32
    %176 = vector.broadcast %cst_40 : f32 to vector<8x32xf32>
    %177 = arith.addf %176, %175 : vector<8x32xf32>
    %178 = arith.divf %176, %177 : vector<8x32xf32>
    %179 = vector.extract_strided_slice %166 {offsets = [0, 64], sizes = [8, 32], strides = [1, 1]} : vector<8x128xf32> to vector<8x32xf32>
    %180 = math.tanh %179 : vector<8x32xf32>
    %181 = vector.extract_strided_slice %166 {offsets = [0, 96], sizes = [8, 32], strides = [1, 1]} : vector<8x128xf32> to vector<8x32xf32>
    %182 = arith.negf %181 : vector<8x32xf32>
    %183 = math.exp %182 : vector<8x32xf32>
    %cst_41 = arith.constant 1.000000e+00 : f32
    %184 = vector.broadcast %cst_41 : f32 to vector<8x32xf32>
    %185 = arith.addf %184, %183 : vector<8x32xf32>
    %186 = arith.divf %184, %185 : vector<8x32xf32>
    %187 = arith.mulf %178, %158 : vector<8x32xf32>
    %188 = arith.mulf %172, %180 : vector<8x32xf32>
    %189 = arith.addf %187, %188 : vector<8x32xf32>
    %190 = math.tanh %189 : vector<8x32xf32>
    %191 = arith.mulf %186, %190 : vector<8x32xf32>
    %c6_i32 = arith.constant 6 : i32
    %192 = arith.index_cast %c6_i32 : i32 to index
    %c0_42 = arith.constant 0 : index
    %c0_43 = arith.constant 0 : index
    %193 = vector.load %arg1[%192, %c0_42, %c0_43] : memref<8x8x128xf32, #tpu.memory_space<vmem>>, vector<1x8x128xf32>
    %194 = vector.shape_cast %193 : vector<1x8x128xf32> to vector<8x128xf32>
    %195 = arith.truncf %191 : vector<8x32xf32> to vector<8x32xbf16>
    %cst_44 = arith.constant dense<0.000000e+00> : vector<8x128xf32>
    %196 = tpu.matmul %195, %3, %cst_44 {dimension_numbers = #tpu.dot_dimension_numbers<[1], [0], [0], [1], [0, 0, 1, 1], [], []>} : vector<8x32xbf16>, vector<32x128xbf16>, vector<8x128xf32> -> vector<8x128xf32>
    %197 = arith.addf %194, %196 : vector<8x128xf32>
    %198 = vector.extract_strided_slice %197 {offsets = [0, 0], sizes = [8, 32], strides = [1, 1]} : vector<8x128xf32> to vector<8x32xf32>
    %199 = arith.negf %198 : vector<8x32xf32>
    %200 = math.exp %199 : vector<8x32xf32>
    %cst_45 = arith.constant 1.000000e+00 : f32
    %201 = vector.broadcast %cst_45 : f32 to vector<8x32xf32>
    %202 = arith.addf %201, %200 : vector<8x32xf32>
    %203 = arith.divf %201, %202 : vector<8x32xf32>
    %204 = vector.extract_strided_slice %197 {offsets = [0, 32], sizes = [8, 32], strides = [1, 1]} : vector<8x128xf32> to vector<8x32xf32>
    %205 = arith.negf %204 : vector<8x32xf32>
    %206 = math.exp %205 : vector<8x32xf32>
    %cst_46 = arith.constant 1.000000e+00 : f32
    %207 = vector.broadcast %cst_46 : f32 to vector<8x32xf32>
    %208 = arith.addf %207, %206 : vector<8x32xf32>
    %209 = arith.divf %207, %208 : vector<8x32xf32>
    %210 = vector.extract_strided_slice %197 {offsets = [0, 64], sizes = [8, 32], strides = [1, 1]} : vector<8x128xf32> to vector<8x32xf32>
    %211 = math.tanh %210 : vector<8x32xf32>
    %212 = vector.extract_strided_slice %197 {offsets = [0, 96], sizes = [8, 32], strides = [1, 1]} : vector<8x128xf32> to vector<8x32xf32>
    %213 = arith.negf %212 : vector<8x32xf32>
    %214 = math.exp %213 : vector<8x32xf32>
    %cst_47 = arith.constant 1.000000e+00 : f32
    %215 = vector.broadcast %cst_47 : f32 to vector<8x32xf32>
    %216 = arith.addf %215, %214 : vector<8x32xf32>
    %217 = arith.divf %215, %216 : vector<8x32xf32>
    %218 = arith.mulf %209, %189 : vector<8x32xf32>
    %219 = arith.mulf %203, %211 : vector<8x32xf32>
    %220 = arith.addf %218, %219 : vector<8x32xf32>
    %221 = math.tanh %220 : vector<8x32xf32>
    %222 = arith.mulf %217, %221 : vector<8x32xf32>
    %c7_i32 = arith.constant 7 : i32
    %223 = arith.index_cast %c7_i32 : i32 to index
    %c0_48 = arith.constant 0 : index
    %c0_49 = arith.constant 0 : index
    %224 = vector.load %arg1[%223, %c0_48, %c0_49] : memref<8x8x128xf32, #tpu.memory_space<vmem>>, vector<1x8x128xf32>
    %225 = vector.shape_cast %224 : vector<1x8x128xf32> to vector<8x128xf32>
    %226 = arith.truncf %222 : vector<8x32xf32> to vector<8x32xbf16>
    %cst_50 = arith.constant dense<0.000000e+00> : vector<8x128xf32>
    %227 = tpu.matmul %226, %3, %cst_50 {dimension_numbers = #tpu.dot_dimension_numbers<[1], [0], [0], [1], [0, 0, 1, 1], [], []>} : vector<8x32xbf16>, vector<32x128xbf16>, vector<8x128xf32> -> vector<8x128xf32>
    %228 = arith.addf %225, %227 : vector<8x128xf32>
    %229 = vector.extract_strided_slice %228 {offsets = [0, 0], sizes = [8, 32], strides = [1, 1]} : vector<8x128xf32> to vector<8x32xf32>
    %230 = arith.negf %229 : vector<8x32xf32>
    %231 = math.exp %230 : vector<8x32xf32>
    %cst_51 = arith.constant 1.000000e+00 : f32
    %232 = vector.broadcast %cst_51 : f32 to vector<8x32xf32>
    %233 = arith.addf %232, %231 : vector<8x32xf32>
    %234 = arith.divf %232, %233 : vector<8x32xf32>
    %235 = vector.extract_strided_slice %228 {offsets = [0, 32], sizes = [8, 32], strides = [1, 1]} : vector<8x128xf32> to vector<8x32xf32>
    %236 = arith.negf %235 : vector<8x32xf32>
    %237 = math.exp %236 : vector<8x32xf32>
    %cst_52 = arith.constant 1.000000e+00 : f32
    %238 = vector.broadcast %cst_52 : f32 to vector<8x32xf32>
    %239 = arith.addf %238, %237 : vector<8x32xf32>
    %240 = arith.divf %238, %239 : vector<8x32xf32>
    %241 = vector.extract_strided_slice %228 {offsets = [0, 64], sizes = [8, 32], strides = [1, 1]} : vector<8x128xf32> to vector<8x32xf32>
    %242 = math.tanh %241 : vector<8x32xf32>
    %243 = vector.extract_strided_slice %228 {offsets = [0, 96], sizes = [8, 32], strides = [1, 1]} : vector<8x128xf32> to vector<8x32xf32>
    %244 = arith.negf %243 : vector<8x32xf32>
    %245 = math.exp %244 : vector<8x32xf32>
    %cst_53 = arith.constant 1.000000e+00 : f32
    %246 = vector.broadcast %cst_53 : f32 to vector<8x32xf32>
    %247 = arith.addf %246, %245 : vector<8x32xf32>
    %248 = arith.divf %246, %247 : vector<8x32xf32>
    %249 = arith.mulf %240, %220 : vector<8x32xf32>
    %250 = arith.mulf %234, %242 : vector<8x32xf32>
    %251 = arith.addf %249, %250 : vector<8x32xf32>
    %252 = math.tanh %251 : vector<8x32xf32>
    %253 = arith.mulf %248, %252 : vector<8x32xf32>
    %c8_i32 = arith.constant 8 : i32
    %c0_54 = arith.constant 0 : index
    %c0_55 = arith.constant 0 : index
    %254 = vector.load %arg6[%c0_54, %c0_55] : memref<8x32xf32, #tpu.memory_space<vmem>>, vector<8x32xf32>
    tpu.vector_store %arg6[%c0_54, %c0_55], %253 {strides = array<i32>} : memref<8x32xf32, #tpu.memory_space<vmem>>, vector<8x32xf32>,
    %c0_56 = arith.constant 0 : index
    %c0_57 = arith.constant 0 : index
    %255 = vector.load %arg7[%c0_56, %c0_57] : memref<8x32xf32, #tpu.memory_space<vmem>>, vector<8x32xf32>
    tpu.vector_store %arg7[%c0_56, %c0_57], %251 {strides = array<i32>} : memref<8x32xf32, #tpu.memory_space<vmem>>, vector<8x32xf32>,
    %c0_i32_58 = arith.constant 0 : i32
    %256 = arith.cmpi eq, %arg0, %c0_i32_58 : i32
    %257 = arith.extui %256 : i1 to i32
    %c0_i32_59 = arith.constant 0 : i32
    %258 = arith.cmpi ne, %257, %c0_i32_59 : i32
    scf.if %258 {
      %c0_60 = arith.constant 0 : index
      %c0_61 = arith.constant 0 : index
      %259 = vector.load %arg3[%c0_60, %c0_61] : memref<32x128xf32, #tpu.memory_space<vmem>>, vector<32x128xf32>
      %cst_62 = arith.constant dense<0.000000e+00> : vector<8x128xf32>
      %260 = tpu.matmul %253, %259, %cst_62 {dimension_numbers = #tpu.dot_dimension_numbers<[1], [0], [0], [1], [0, 0, 1, 1], [], []>} : vector<8x32xf32>, vector<32x128xf32>, vector<8x128xf32> -> vector<8x128xf32>
      %c0_63 = arith.constant 0 : index
      %c0_64 = arith.constant 0 : index
      %261 = vector.load %arg4[%c0_63, %c0_64] : memref<1x128xf32, #tpu.memory_space<vmem>>, vector<1x128xf32>
      %262 = vector.broadcast %261 : vector<1x128xf32> to vector<8x128xf32>
      %263 = arith.addf %260, %262 : vector<8x128xf32>
      %c0_65 = arith.constant 0 : index
      %c0_66 = arith.constant 0 : index
      %264 = vector.load %arg5[%c0_65, %c0_66] : memref<8x128xf32, #tpu.memory_space<vmem>>, vector<8x128xf32>
      tpu.vector_store %arg5[%c0_65, %c0_66], %263 {strides = array<i32>} : memref<8x128xf32, #tpu.memory_space<vmem>>, vector<8x128xf32>,
    } else {
    }
    return
  }
  func.func @transform_0(%arg0: i32) -> (i32, i32, i32) {
    %c0_i32 = arith.constant 0 : i32
    %c0_i32_0 = arith.constant 0 : i32
    %c0_i32_1 = arith.constant 0 : i32
    return %arg0, %c0_i32, %c0_i32_0 : i32, i32, i32
  }
  func.func @transform_1(%arg0: i32) -> (i32, i32) {
    %c0_i32 = arith.constant 0 : i32
    %c0_i32_0 = arith.constant 0 : i32
    %c0_i32_1 = arith.constant 0 : i32
    return %c0_i32, %c0_i32_0 : i32, i32
  }
  func.func @transform_2(%arg0: i32) -> (i32, i32) {
    %c0_i32 = arith.constant 0 : i32
    %c0_i32_0 = arith.constant 0 : i32
    %c0_i32_1 = arith.constant 0 : i32
    return %c0_i32, %c0_i32_0 : i32, i32
  }
  func.func @transform_3(%arg0: i32) -> (i32, i32) {
    %c0_i32 = arith.constant 0 : i32
    %c0_i32_0 = arith.constant 0 : i32
    %c0_i32_1 = arith.constant 0 : i32
    return %c0_i32, %c0_i32_0 : i32, i32
  }
  func.func @transform_4(%arg0: i32) -> (i32, i32) {
    %c0_i32 = arith.constant 0 : i32
    %c0_i32_0 = arith.constant 0 : i32
    %c0_i32_1 = arith.constant 0 : i32
    return %c0_i32, %c0_i32_0 : i32, i32
  }
}

</mosaic_0001>

<llo_original>
// kernel: lstm_classifier.2
$region0: #{lstm_classifier.2}
  #allocation0 [shape = 'u32[]', space=smem, size = 0x4, offset = 0x4, fixed_abs, tag = 'smem constant byte address 0x4 - core index']
  #allocation1 [shape = 'u32[72,128]{1,0:T(1,128)}', space=vmem, size = 0x9000, scoped, tag = 'internal scratch']
  %s0 = inlined_call_operand.vmem [shape: bf16[64,16], index: 0, kind: input, shape index: {}]
  %s1 = inlined_call_operand.vmem [shape: bf16[16,128], index: 1, kind: input, shape index: {}]
  %s2 = inlined_call_operand.vmem [shape: f32[1,128], index: 2, kind: input, shape index: {}]
  %s3 = inlined_call_operand.vmem [shape: f32[64,128], index: 3, kind: output, shape index: {}]
  %s4 = sld [smem:[#allocation0]]
  $region22: #{lstm_classifier.2} parent=0
    _
  %s6 = ssub.s32 1, %s4
  %s7 = scalar_select 0, %s6, %s4
  // Predicated region
  $region2: #{lstm_classifier.2} parent=0 // pred_check
    _
  $region3: #{lstm_classifier.2} parent=0 // pred_check_branch
    %9 = sbr.rel (0) target = $region5
  $region4: #{lstm_classifier.2} parent=0 // pred_region
    _
  $region5: #{lstm_classifier.2} parent=0 // pred_fallthru
    _
  // Predicated region
  $region6: #{lstm_classifier.2} parent=0 // pred_check
    _
  $region7: #{lstm_classifier.2} parent=0 // pred_check_branch
    %11 = sbr.rel (0) target = $region9
  $region8: #{lstm_classifier.2} parent=0 // pred_region
    _
  $region9: #{lstm_classifier.2} parent=0 // pred_fallthru
    _
  // Predicated region
  $region10: #{lstm_classifier.2} parent=0 // pred_check
    _
  $region11: #{lstm_classifier.2} parent=0 // pred_check_branch
    %13 = sbr.rel (0) target = $region13
  $region12: #{lstm_classifier.2} parent=0 // pred_region
    _
  $region13: #{lstm_classifier.2} parent=0 // pred_fallthru
    _
  %v15 = vld [vmem:[%s0] sm:$0xf]
  %v16 = vld [vmem:[%s0 + $0x4] sm:$0xf]
  %v17 = vld [vmem:[%s0 + $0x8] sm:$0xf]
  %v18 = vld [vmem:[%s0 + $0xc] sm:$0xf]
  %v19 = vld [vmem:[%s0 + $0x10] sm:$0xf]
  %v20 = vld [vmem:[%s0 + $0x14] sm:$0xf]
  %v21 = vld [vmem:[%s0 + $0x18] sm:$0xf]
  %v22 = vld [vmem:[%s0 + $0x1c] sm:$0xf]
  %v23 = vld [vmem:[%s1] sm:$0xf]
  %v24 = vld [vmem:[%s1 + $0x4] sm:$0xf]
  %v25 = vld [vmem:[%s2] sm:$0x1]
  %v27 = vperm.slane %v25, 0
  %v37 = vunpack.c.l.b16 %v15
  %v38 = vunpack.c.l.b16 %v16
  %v39 = vunpack.c.l.b16 %v17
  %v40 = vunpack.c.l.b16 %v18
  %v41 = vunpack.c.l.b16 %v19
  %v42 = vunpack.c.l.b16 %v20
  %v43 = vunpack.c.l.b16 %v21
  %v44 = vunpack.c.l.b16 %v22
  %v45 = vpack.c.b16 %v38, %v37
  %v46 = vpack.c.b16 %v40, %v39
  %v47 = vpack.c.b16 %v42, %v41
  %v48 = vpack.c.b16 %v44, %v43
  %v51 = vunpack.c.l.b16 %v23
  %v52 = vunpack.c.l.b16 %v24
  %v53 = vpack.c.b16 %v52, %v51
  %vm55 = vcmask 130048
  %v57 = vsel %vm55, %v45, 0
  %v60 = vsel %vm55, %v46, 0
  %v63 = vsel %vm55, %v47, 0
  %v66 = vsel %vm55, %v48, 0
  %68 = vmatpush.bf16.msra.mxu0 0
  %69 = vmatpush.bf16.msra.mxu0 0
  %70 = vmatpush.bf16.msra.mxu0 0
  %71 = vmatpush.bf16.msra.mxu0 0
  %72 = vmatpush.bf16.msra.mxu0 0
  %73 = vmatpush.bf16.msra.mxu0 0
  %74 = vmatpush.bf16.msra.mxu0 0
  %75 = vmatpush.bf16.msra.mxu0 %v53
  %76 = vmatmul.bf16.gmra.mxu0 %v57
  %v77 = vpop.f32.mrf.mxu0
  %v78 = vadd.f32 %v27, %v77
  %v79 = vpop.f32.mrf.mxu0
  %v80 = vadd.f32 %v27, %v79
  %81 = vmatmul.bf16.gmra.mxu0 %v60
  %v82 = vpop.f32.mrf.mxu0
  %v83 = vadd.f32 %v27, %v82
  %v84 = vpop.f32.mrf.mxu0
  %v85 = vadd.f32 %v27, %v84
  %86 = vmatmul.bf16.gmra.mxu0 %v63
  %v87 = vpop.f32.mrf.mxu0
  %v88 = vadd.f32 %v27, %v87
  %v89 = vpop.f32.mrf.mxu0
  %v90 = vadd.f32 %v27, %v89
  %91 = vmatmul.bf16.gmra.mxu0 %v66
  %v92 = vpop.f32.mrf.mxu0
  %v93 = vadd.f32 %v27, %v92
  %v94 = vpop.f32.mrf.mxu0
  %v95 = vadd.f32 %v27, %v94
  %96 = vdwg.mxu0
  %97 = vst [vmem:[%s3] sm:$0xff] %v78
  %98 = vst [vmem:[%s3 + $0x8] sm:$0xff] %v80
  %99 = vst [vmem:[%s3 + $0x10] sm:$0xff] %v83
  %100 = vst [vmem:[%s3 + $0x18] sm:$0xff] %v85
  %101 = vst [vmem:[%s3 + $0x20] sm:$0xff] %v88
  %102 = vst [vmem:[%s3 + $0x28] sm:$0xff] %v90
  %103 = vst [vmem:[%s3 + $0x30] sm:$0xff] %v93
  %104 = vst [vmem:[%s3 + $0x38] sm:$0xff] %v95
  // Predicated region
  $region14: #{lstm_classifier.2} parent=0 // pred_check
    _
  $region15: #{lstm_classifier.2} parent=0 // pred_check_branch
    %106 = sbr.rel (0) target = $region17
  $region16: #{lstm_classifier.2} parent=0 // pred_region
    _
  $region17: #{lstm_classifier.2} parent=0 // pred_fallthru
    _
  // Predicated region
  $region18: #{lstm_classifier.2} parent=0 // pred_check
    _
  $region19: #{lstm_classifier.2} parent=0 // pred_check_branch
    %108 = sbr.rel (0) target = $region21
  $region20: #{lstm_classifier.2} parent=0 // pred_region
    _
  $region21: #{lstm_classifier.2} parent=0 // pred_fallthru
    _

// kernel: lstm_classifier.3
$region0: #{lstm_classifier.3}
  #allocation0 [shape = 'u32[]', space=smem, size = 0x4, offset = 0x4, fixed_abs, tag = 'smem constant byte address 0x4 - core index']
  #allocation1 [shape = 'u32[72,128]{1,0:T(1,128)}', space=vmem, size = 0x9000, scoped, tag = 'internal scratch']
  #allocation2 [shape = 'f32[8,32]{1,0:T(8,128)}', space=vmem, size = 0x1000, scoped, tag = 'scratch operand']
  #allocation3 [shape = 'f32[8,32]{1,0:T(8,128)}', space=vmem, size = 0x1000, scoped, tag = 'scratch operand']
  %s0 = inlined_call_operand.vmem [shape: f32[8,8,128], index: 0, kind: input, shape index: {}]
  %s1 = inlined_call_operand.vmem [shape: bf16[32,128], index: 1, kind: input, shape index: {}]
  %s2 = inlined_call_operand.vmem [shape: f32[32,128], index: 2, kind: input, shape index: {}]
  %s3 = inlined_call_operand.vmem [shape: f32[1,128], index: 3, kind: input, shape index: {}]
  %s4 = inlined_call_operand.vmem [shape: f32[8,128], index: 4, kind: output, shape index: {}]
  %s5 = sld [smem:[#allocation0]]
  $region34: #{lstm_classifier.3} parent=0
    _
  %s7 = ssub.s32 1, %s5
  %s8 = scalar_select 0, %s7, %s5
  // Predicated region
  $region2: #{lstm_classifier.3} parent=0 // pred_check
    _
  $region3: #{lstm_classifier.3} parent=0 // pred_check_branch
    %10 = sbr.rel (0) target = $region5
  $region4: #{lstm_classifier.3} parent=0 // pred_region
    _
  $region5: #{lstm_classifier.3} parent=0 // pred_fallthru
    _
  // Predicated region
  $region6: #{lstm_classifier.3} parent=0 // pred_check
    _
  $region7: #{lstm_classifier.3} parent=0 // pred_check_branch
    %12 = sbr.rel (0) target = $region9
  $region8: #{lstm_classifier.3} parent=0 // pred_region
    _
  $region9: #{lstm_classifier.3} parent=0 // pred_fallthru
    _
  // Predicated region
  $region10: #{lstm_classifier.3} parent=0 // pred_check
    _
  $region11: #{lstm_classifier.3} parent=0 // pred_check_branch
    %14 = sbr.rel (0) target = $region13
  $region12: #{lstm_classifier.3} parent=0 // pred_region
    _
  $region13: #{lstm_classifier.3} parent=0 // pred_fallthru
    _
  // Predicated region
  $region14: #{lstm_classifier.3} parent=0 // pred_check
    _
  $region15: #{lstm_classifier.3} parent=0 // pred_check_branch
    %16 = sbr.rel (0) target = $region17
  $region16: #{lstm_classifier.3} parent=0 // pred_region
    _
  $region17: #{lstm_classifier.3} parent=0 // pred_fallthru
    _
  %p18 = scmp.eq.s32.totalorder 0, 0
  // Predicated region
  $region18: #{lstm_classifier.3} parent=0 // pred_check
    %p19 = pneg %p18
  $region19: #{lstm_classifier.3} parent=0 // pred_check_branch
    %21 = sbr.rel (%p19) target = $region21
  $region20: #{lstm_classifier.3} parent=0 // pred_region
    %vm22 = vcmask 261120
    %23 = vst.msk [vmem:[#allocation2] sm:$0xff] %vm22, 0.0
    %24 = vst.msk [vmem:[#allocation3] sm:$0xff] %vm22, 0.0
  $region21: #{lstm_classifier.3} parent=0 // pred_fallthru
    _
  %v25 = vld [vmem:[%s1] sm:$0xf]
  %v26 = vld [vmem:[%s1 + $0x4] sm:$0xf]
  %v27 = vld [vmem:[%s1 + $0x8] sm:$0xf]
  %v28 = vld [vmem:[%s1 + $0xc] sm:$0xf]
  %v29 = vld [vmem:[#allocation2] sm:$0xff]
  %v30 = vld [vmem:[#allocation3] sm:$0xff]
  %v31 = vld [vmem:[%s0] sm:$0xff]
  %v32 = vpack.c.bf16 %v29, %v29
  %v37 = vunpack.c.l.b16 %v25
  %v38 = vunpack.c.l.b16 %v26
  %v39 = vunpack.c.l.b16 %v27
  %v40 = vunpack.c.l.b16 %v28
  %v41 = vpack.c.b16 %v38, %v37
  %v42 = vpack.c.b16 %v40, %v39
  %vm45 = vcmask 261120
  %v47 = vsel %vm45, %v32, 0
  %49 = vmatpush.bf16.msra.mxu0 0
  %50 = vmatpush.bf16.msra.mxu0 0
  %51 = vmatpush.bf16.msra.mxu0 0
  %52 = vmatpush.bf16.msra.mxu0 0
  %53 = vmatpush.bf16.msra.mxu0 0
  %54 = vmatpush.bf16.msra.mxu0 0
  %55 = vmatpush.bf16.msra.mxu0 %v42
  %56 = vmatpush.bf16.msra.mxu0 %v41
  %57 = vmatmul.bf16.gmra.mxu0 %v47
  %v58 = vpop.f32.mrf.mxu0
  %v59 = vadd.f32 0.0, %v58
  %v60 = vpop.f32.mrf.mxu0
  %61 = vdwg.mxu0
  %v62 = vadd.f32 %v31, %v59
  %v63 = vxor.u32 %v62, 2147483648
  %v64 = vmul.f32 %v63, 1.442695
  %v65 = vpow.pop %v64
  %v66 = vadd.f32 %v65, 1.0
  %v67 = vrcp.pop %v66
  %v68 = vmul.f32 %v66, %v67
  %v69 = vsub.f32 1.0, %v68
  %v70 = vmul.f32 %v67, %v69
  %v71 = vadd.f32 %v67, %v70
  %vm72 = vweird.f32 %v66
  %vm73 = vweird.f32 %v67
  %vm74 = vmor %vm72, %vm73
  %v75 = vsel %vm74, %v67, %v71
  %v76 = vand.u32 2147483647, %v66
  %vm77 = vcmp.eq.f32.partialorder %v76, 8.507059e+37
  %v78 = vand.u32 %v66, 2147483648
  %v79 = vor.u32 1.1754944e-38, %v78
  %v80 = vsel %vm77, %v79, %v75
  %v81 = vmul.f32 1.0, %v80
  %v82 = vtanh.pop %v62
  %84 = vrot.lane.b32.xlu0 %v30, 32
  %v85 = vpop.permute.xlu0 %84
  %v87 = vmul.f32 %v81, %v85
  %89 = vrot.lane.b32.xlu0 %v82, 64
  %v90 = vpop.permute.xlu0 %89
  %v92 = vmul.f32 %v81, %v90
  %94 = vrot.lane.b32.xlu0 %v92, 32
  %v95 = vpop.permute.xlu0 %94
  %v97 = vadd.f32 %v87, %v95
  %v98 = vtanh.pop %v97
  %100 = vrot.lane.b32.xlu0 %v98, 64
  %v101 = vpop.permute.xlu0 %100
  %v103 = vmul.f32 %v81, %v101
  %s104 = scalar_lea.vmem %s0, 8
  %v105 = vld [vmem:[%s104] sm:$0xff]
  %v106 = vpack.c.bf16 %v103, %v103
  %108 = vrot.lane.b32.xlu0 %v106, 32
  %v109 = vpop.permute.xlu0 %108
  %v111 = vsel %vm45, %v109, 0
  %113 = vmatpush.bf16.msra.mxu0 0
  %114 = vmatpush.bf16.msra.mxu0 0
  %115 = vmatpush.bf16.msra.mxu0 0
  %116 = vmatpush.bf16.msra.mxu0 0
  %117 = vmatpush.bf16.msra.mxu0 0
  %118 = vmatpush.bf16.msra.mxu0 0
  %119 = vmatpush.bf16.msra.mxu0 %v42
  %120 = vmatpush.bf16.msra.mxu0 %v41
  %121 = vmatmul.bf16.gmra.mxu0 %v111
  %v122 = vpop.f32.mrf.mxu0
  %v123 = vadd.f32 0.0, %v122
  %v124 = vpop.f32.mrf.mxu0
  %125 = vdwg.mxu0
  %v126 = vadd.f32 %v105, %v123
  %v127 = vxor.u32 %v126, 2147483648
  %v128 = vmul.f32 %v127, 1.442695
  %v129 = vpow.pop %v128
  %v130 = vadd.f32 %v129, 1.0
  %v131 = vrcp.pop %v130
  %v132 = vmul.f32 %v130, %v131
  %v133 = vsub.f32 1.0, %v132
  %v134 = vmul.f32 %v131, %v133
  %v135 = vadd.f32 %v131, %v134
  %vm136 = vweird.f32 %v130
  %vm137 = vweird.f32 %v131
  %vm138 = vmor %vm136, %vm137
  %v139 = vsel %vm138, %v131, %v135
  %v140 = vand.u32 2147483647, %v130
  %vm141 = vcmp.eq.f32.partialorder %v140, 8.507059e+37
  %v142 = vand.u32 %v130, 2147483648
  %v143 = vor.u32 1.1754944e-38, %v142
  %v144 = vsel %vm141, %v143, %v139
  %v145 = vmul.f32 1.0, %v144
  %v146 = vtanh.pop %v126
  %v147 = vmul.f32 %v145, %v97
  %149 = vrot.lane.b32.xlu0 %v146, 64
  %v150 = vpop.permute.xlu0 %149
  %v152 = vmul.f32 %v145, %v150
  %154 = vrot.lane.b32.xlu0 %v152, 32
  %v155 = vpop.permute.xlu0 %154
  %v157 = vadd.f32 %v147, %v155
  %v158 = vtanh.pop %v157
  %160 = vrot.lane.b32.xlu0 %v158, 64
  %v161 = vpop.permute.xlu0 %160
  %v163 = vmul.f32 %v145, %v161
  %s164 = scalar_lea.vmem %s0, 16
  %v165 = vld [vmem:[%s164] sm:$0xff]
  %v166 = vpack.c.bf16 %v163, %v163
  %168 = vrot.lane.b32.xlu0 %v166, 32
  %v169 = vpop.permute.xlu0 %168
  %v171 = vsel %vm45, %v169, 0
  %173 = vmatpush.bf16.msra.mxu0 0
  %174 = vmatpush.bf16.msra.mxu0 0
  %175 = vmatpush.bf16.msra.mxu0 0
  %176 = vmatpush.bf16.msra.mxu0 0
  %177 = vmatpush.bf16.msra.mxu0 0
  %178 = vmatpush.bf16.msra.mxu0 0
  %179 = vmatpush.bf16.msra.mxu0 %v42
  %180 = vmatpush.bf16.msra.mxu0 %v41
  %181 = vmatmul.bf16.gmra.mxu0 %v171
  %v182 = vpop.f32.mrf.mxu0
  %v183 = vadd.f32 0.0, %v182
  %v184 = vpop.f32.mrf.mxu0
  %185 = vdwg.mxu0
  %v186 = vadd.f32 %v165, %v183
  %v187 = vxor.u32 %v186, 2147483648
  %v188 = vmul.f32 %v187, 1.442695
  %v189 = vpow.pop %v188
  %v190 = vadd.f32 %v189, 1.0
  %v191 = vrcp.pop %v190
  %v192 = vmul.f32 %v190, %v191
  %v193 = vsub.f32 1.0, %v192
  %v194 = vmul.f32 %v191, %v193
  %v195 = vadd.f32 %v191, %v194
  %vm196 = vweird.f32 %v190
  %vm197 = vweird.f32 %v191
  %vm198 = vmor %vm196, %vm197
  %v199 = vsel %vm198, %v191, %v195
  %v200 = vand.u32 2147483647, %v190
  %vm201 = vcmp.eq.f32.partialorder %v200, 8.507059e+37
  %v202 = vand.u32 %v190, 2147483648
  %v203 = vor.u32 1.1754944e-38, %v202
  %v204 = vsel %vm201, %v203, %v199
  %v205 = vmul.f32 1.0, %v204
  %v206 = vtanh.pop %v186
  %v207 = vmul.f32 %v205, %v157
  %209 = vrot.lane.b32.xlu0 %v206, 64
  %v210 = vpop.permute.xlu0 %209
  %v212 = vmul.f32 %v205, %v210
  %214 = vrot.lane.b32.xlu0 %v212, 32
  %v215 = vpop.permute.xlu0 %214
  %v217 = vadd.f32 %v207, %v215
  %v218 = vtanh.pop %v217
  %220 = vrot.lane.b32.xlu0 %v218, 64
  %v221 = vpop.permute.xlu0 %220
  %v223 = vmul.f32 %v205, %v221
  %s224 = scalar_lea.vmem %s0, 24
  %v225 = vld [vmem:[%s224] sm:$0xff]
  %v226 = vpack.c.bf16 %v223, %v223
  %228 = vrot.lane.b32.xlu0 %v226, 32
  %v229 = vpop.permute.xlu0 %228
  %v231 = vsel %vm45, %v229, 0
  %233 = vmatpush.bf16.msra.mxu0 0
  %234 = vmatpush.bf16.msra.mxu0 0
  %235 = vmatpush.bf16.msra.mxu0 0
  %236 = vmatpush.bf16.msra.mxu0 0
  %237 = vmatpush.bf16.msra.mxu0 0
  %238 = vmatpush.bf16.msra.mxu0 0
  %239 = vmatpush.bf16.msra.mxu0 %v42
  %240 = vmatpush.bf16.msra.mxu0 %v41
  %241 = vmatmul.bf16.gmra.mxu0 %v231
  %v242 = vpop.f32.mrf.mxu0
  %v243 = vadd.f32 0.0, %v242
  %v244 = vpop.f32.mrf.mxu0
  %245 = vdwg.mxu0
  %v246 = vadd.f32 %v225, %v243
  %v247 = vxor.u32 %v246, 2147483648
  %v248 = vmul.f32 %v247, 1.442695
  %v249 = vpow.pop %v248
  %v250 = vadd.f32 %v249, 1.0
  %v251 = vrcp.pop %v250
  %v252 = vmul.f32 %v250, %v251
  %v253 = vsub.f32 1.0, %v252
  %v254 = vmul.f32 %v251, %v253
  %v255 = vadd.f32 %v251, %v254
  %vm256 = vweird.f32 %v250
  %vm257 = vweird.f32 %v251
  %vm258 = vmor %vm256, %vm257
  %v259 = vsel %vm258, %v251, %v255
  %v260 = vand.u32 2147483647, %v250
  %vm261 = vcmp.eq.f32.partialorder %v260, 8.507059e+37
  %v262 = vand.u32 %v250, 2147483648
  %v263 = vor.u32 1.1754944e-38, %v262
  %v264 = vsel %vm261, %v263, %v259
  %v265 = vmul.f32 1.0, %v264
  %v266 = vtanh.pop %v246
  %v267 = vmul.f32 %v265, %v217
  %269 = vrot.lane.b32.xlu0 %v266, 64
  %v270 = vpop.permute.xlu0 %269
  %v272 = vmul.f32 %v265, %v270
  %274 = vrot.lane.b32.xlu0 %v272, 32
  %v275 = vpop.permute.xlu0 %274
  %v277 = vadd.f32 %v267, %v275
  %v278 = vtanh.pop %v277
  %280 = vrot.lane.b32.xlu0 %v278, 64
  %v281 = vpop.permute.xlu0 %280
  %v283 = vmul.f32 %v265, %v281
  %s284 = scalar_lea.vmem %s0, 32
  %v285 = vld [vmem:[%s284] sm:$0xff]
  %v286 = vpack.c.bf16 %v283, %v283
  %288 = vrot.lane.b32.xlu0 %v286, 32
  %v289 = vpop.permute.xlu0 %288
  %v291 = vsel %vm45, %v289, 0
  %293 = vmatpush.bf16.msra.mxu0 0
  %294 = vmatpush.bf16.msra.mxu0 0
  %295 = vmatpush.bf16.msra.mxu0 0
  %296 = vmatpush.bf16.msra.mxu0 0
  %297 = vmatpush.bf16.msra.mxu0 0
  %298 = vmatpush.bf16.msra.mxu0 0
  %299 = vmatpush.bf16.msra.mxu0 %v42
  %300 = vmatpush.bf16.msra.mxu0 %v41
  %301 = vmatmul.bf16.gmra.mxu0 %v291
  %v302 = vpop.f32.mrf.mxu0
  %v303 = vadd.f32 0.0, %v302
  %v304 = vpop.f32.mrf.mxu0
  %305 = vdwg.mxu0
  %v306 = vadd.f32 %v285, %v303
  %v307 = vxor.u32 %v306, 2147483648
  %v308 = vmul.f32 %v307, 1.442695
  %v309 = vpow.pop %v308
  %v310 = vadd.f32 %v309, 1.0
  %v311 = vrcp.pop %v310
  %v312 = vmul.f32 %v310, %v311
  %v313 = vsub.f32 1.0, %v312
  %v314 = vmul.f32 %v311, %v313
  %v315 = vadd.f32 %v311, %v314
  %vm316 = vweird.f32 %v310
  %vm317 = vweird.f32 %v311
  %vm318 = vmor %vm316, %vm317
  %v319 = vsel %vm318, %v311, %v315
  %v320 = vand.u32 2147483647, %v310
  %vm321 = vcmp.eq.f32.partialorder %v320, 8.507059e+37
  %v322 = vand.u32 %v310, 2147483648
  %v323 = vor.u32 1.1754944e-38, %v322
  %v324 = vsel %vm321, %v323, %v319
  %v325 = vmul.f32 1.0, %v324
  %v326 = vtanh.pop %v306
  %v327 = vmul.f32 %v325, %v277
  %329 = vrot.lane.b32.xlu0 %v326, 64
  %v330 = vpop.permute.xlu0 %329
  %v332 = vmul.f32 %v325, %v330
  %334 = vrot.lane.b32.xlu0 %v332, 32
  %v335 = vpop.permute.xlu0 %334
  %v337 = vadd.f32 %v327, %v335
  %v338 = vtanh.pop %v337
  %340 = vrot.lane.b32.xlu0 %v338, 64
  %v341 = vpop.permute.xlu0 %340
  %v343 = vmul.f32 %v325, %v341
  %s344 = scalar_lea.vmem %s0, 40
  %v345 = vld [vmem:[%s344] sm:$0xff]
  %v346 = vpack.c.bf16 %v343, %v343
  %348 = vrot.lane.b32.xlu0 %v346, 32
  %v349 = vpop.permute.xlu0 %348
  %v351 = vsel %vm45, %v349, 0
  %353 = vmatpush.bf16.msra.mxu0 0
  %354 = vmatpush.bf16.msra.mxu0 0
  %355 = vmatpush.bf16.msra.mxu0 0
  %356 = vmatpush.bf16.msra.mxu0 0
  %357 = vmatpush.bf16.msra.mxu0 0
  %358 = vmatpush.bf16.msra.mxu0 0
  %359 = vmatpush.bf16.msra.mxu0 %v42
  %360 = vmatpush.bf16.msra.mxu0 %v41
  %361 = vmatmul.bf16.gmra.mxu0 %v351
  %v362 = vpop.f32.mrf.mxu0
  %v363 = vadd.f32 0.0, %v362
  %v364 = vpop.f32.mrf.mxu0
  %365 = vdwg.mxu0
  %v366 = vadd.f32 %v345, %v363
  %v367 = vxor.u32 %v366, 2147483648
  %v368 = vmul.f32 %v367, 1.442695
  %v369 = vpow.pop %v368
  %v370 = vadd.f32 %v369, 1.0
  %v371 = vrcp.pop %v370
  %v372 = vmul.f32 %v370, %v371
  %v373 = vsub.f32 1.0, %v372
  %v374 = vmul.f32 %v371, %v373
  %v375 = vadd.f32 %v371, %v374
  %vm376 = vweird.f32 %v370
  %vm377 = vweird.f32 %v371
  %vm378 = vmor %vm376, %vm377
  %v379 = vsel %vm378, %v371, %v375
  %v380 = vand.u32 2147483647, %v370
  %vm381 = vcmp.eq.f32.partialorder %v380, 8.507059e+37
  %v382 = vand.u32 %v370, 2147483648
  %v383 = vor.u32 1.1754944e-38, %v382
  %v384 = vsel %vm381, %v383, %v379
  %v385 = vmul.f32 1.0, %v384
  %v386 = vtanh.pop %v366
  %v387 = vmul.f32 %v385, %v337
  %389 = vrot.lane.b32.xlu0 %v386, 64
  %v390 = vpop.permute.xlu0 %389
  %v392 = vmul.f32 %v385, %v390
  %394 = vrot.lane.b32.xlu0 %v392, 32
  %v395 = vpop.permute.xlu0 %394
  %v397 = vadd.f32 %v387, %v395
  %v398 = vtanh.pop %v397
  %400 = vrot.lane.b32.xlu0 %v398, 64
  %v401 = vpop.permute.xlu0 %400
  %v403 = vmul.f32 %v385, %v401
  %s404 = scalar_lea.vmem %s0, 48
  %v405 = vld [vmem:[%s404] sm:$0xff]
  %v406 = vpack.c.bf16 %v403, %v403
  %408 = vrot.lane.b32.xlu0 %v406, 32
  %v409 = vpop.permute.xlu0 %408
  %v411 = vsel %vm45, %v409, 0
  %413 = vmatpush.bf16.msra.mxu0 0
  %414 = vmatpush.bf16.msra.mxu0 0
  %415 = vmatpush.bf16.msra.mxu0 0
  %416 = vmatpush.bf16.msra.mxu0 0
  %417 = vmatpush.bf16.msra.mxu0 0
  %418 = vmatpush.bf16.msra.mxu0 0
  %419 = vmatpush.bf16.msra.mxu0 %v42
  %420 = vmatpush.bf16.msra.mxu0 %v41
  %421 = vmatmul.bf16.gmra.mxu0 %v411
  %v422 = vpop.f32.mrf.mxu0
  %v423 = vadd.f32 0.0, %v422
  %v424 = vpop.f32.mrf.mxu0
  %425 = vdwg.mxu0
  %v426 = vadd.f32 %v405, %v423
  %v427 = vxor.u32 %v426, 2147483648
  %v428 = vmul.f32 %v427, 1.442695
  %v429 = vpow.pop %v428
  %v430 = vadd.f32 %v429, 1.0
  %v431 = vrcp.pop %v430
  %v432 = vmul.f32 %v430, %v431
  %v433 = vsub.f32 1.0, %v432
  %v434 = vmul.f32 %v431, %v433
  %v435 = vadd.f32 %v431, %v434
  %vm436 = vweird.f32 %v430
  %vm437 = vweird.f32 %v431
  %vm438 = vmor %vm436, %vm437
  %v439 = vsel %vm438, %v431, %v435
  %v440 = vand.u32 2147483647, %v430
  %vm441 = vcmp.eq.f32.partialorder %v440, 8.507059e+37
  %v442 = vand.u32 %v430, 2147483648
  %v443 = vor.u32 1.1754944e-38, %v442
  %v444 = vsel %vm441, %v443, %v439
  %v445 = vmul.f32 1.0, %v444
  %v446 = vtanh.pop %v426
  %v447 = vmul.f32 %v445, %v397
  %449 = vrot.lane.b32.xlu0 %v446, 64
  %v450 = vpop.permute.xlu0 %449
  %v452 = vmul.f32 %v445, %v450
  %454 = vrot.lane.b32.xlu0 %v452, 32
  %v455 = vpop.permute.xlu0 %454
  %v457 = vadd.f32 %v447, %v455
  %v458 = vtanh.pop %v457
  %460 = vrot.lane.b32.xlu0 %v458, 64
  %v461 = vpop.permute.xlu0 %460
  %v463 = vmul.f32 %v445, %v461
  %s464 = scalar_lea.vmem %s0, 56
  %v465 = vld [vmem:[%s464] sm:$0xff]
  %v466 = vpack.c.bf16 %v463, %v463
  %468 = vrot.lane.b32.xlu0 %v466, 32
  %v469 = vpop.permute.xlu0 %468
  %v471 = vsel %vm45, %v469, 0
  %473 = vmatpush.bf16.msra.mxu0 0
  %474 = vmatpush.bf16.msra.mxu0 0
  %475 = vmatpush.bf16.msra.mxu0 0
  %476 = vmatpush.bf16.msra.mxu0 0
  %477 = vmatpush.bf16.msra.mxu0 0
  %478 = vmatpush.bf16.msra.mxu0 0
  %479 = vmatpush.bf16.msra.mxu0 %v42
  %480 = vmatpush.bf16.msra.mxu0 %v41
  %481 = vmatmul.bf16.gmra.mxu0 %v471
  %v482 = vpop.f32.mrf.mxu0
  %v483 = vadd.f32 0.0, %v482
  %v484 = vpop.f32.mrf.mxu0
  %485 = vdwg.mxu0
  %v486 = vadd.f32 %v465, %v483
  %v487 = vxor.u32 %v486, 2147483648
  %v488 = vmul.f32 %v487, 1.442695
  %v489 = vpow.pop %v488
  %v490 = vadd.f32 %v489, 1.0
  %v491 = vrcp.pop %v490
  %v492 = vmul.f32 %v490, %v491
  %v493 = vsub.f32 1.0, %v492
  %v494 = vmul.f32 %v491, %v493
  %v495 = vadd.f32 %v491, %v494
  %vm496 = vweird.f32 %v490
  %vm497 = vweird.f32 %v491
  %vm498 = vmor %vm496, %vm497
  %v499 = vsel %vm498, %v491, %v495
  %v500 = vand.u32 2147483647, %v490
  %vm501 = vcmp.eq.f32.partialorder %v500, 8.507059e+37
  %v502 = vand.u32 %v490, 2147483648
  %v503 = vor.u32 1.1754944e-38, %v502
  %v504 = vsel %vm501, %v503, %v499
  %v505 = vmul.f32 1.0, %v504
  %v506 = vtanh.pop %v486
  %v507 = vmul.f32 %v505, %v457
  %509 = vrot.lane.b32.xlu0 %v506, 64
  %v510 = vpop.permute.xlu0 %509
  %v512 = vmul.f32 %v505, %v510
  %514 = vrot.lane.b32.xlu0 %v512, 32
  %v515 = vpop.permute.xlu0 %514
  %v517 = vadd.f32 %v507, %v515
  %v518 = vtanh.pop %v517
  %520 = vrot.lane.b32.xlu0 %v518, 64
  %v521 = vpop.permute.xlu0 %520
  %v523 = vmul.f32 %v505, %v521
  %525 = vrot.lane.b32.xlu0 %v523, 32
  %v526 = vpop.permute.xlu0 %525
  %528 = vst.msk [vmem:[#allocation2] sm:$0xff] %vm45, %v526
  %530 = vrot.lane.b32.xlu0 %v517, 96
  %v531 = vpop.permute.xlu0 %530
  %533 = vst.msk [vmem:[#allocation3] sm:$0xff] %vm45, %v531
  // Predicated region
  $region22: #{lstm_classifier.3} parent=0 // pred_check
    %p534 = pneg %p18
  $region23: #{lstm_classifier.3} parent=0 // pred_check_branch
    %536 = sbr.rel (%p534) target = $region25
  $region24: #{lstm_classifier.3} parent=0 // pred_region
    %v537 = vld [vmem:[%s2] sm:$0xff]
    %v538 = vld [vmem:[%s2 + $0x8] sm:$0xff]
    %v539 = vld [vmem:[%s2 + $0x10] sm:$0xff]
    %v540 = vld [vmem:[%s2 + $0x18] sm:$0xff]
    %v541 = vld [vmem:[%s3] sm:$0x1]
    %v543 = vperm.slane %v541, 0
    %v545 = vsel %vm45, %v526, 0
    %547 = vmatpush.msra.mxu0 0.0
    %548 = vmatpush.msra.mxu0 0.0
    %549 = vmatpush.msra.mxu0 0.0
    %550 = vmatpush.msra.mxu0 0.0
    %551 = vmatpush.msra.mxu0 0.0
    %552 = vmatpush.msra.mxu0 0.0
    %553 = vmatpush.msra.mxu0 0.0
    %554 = vmatpush.msra.mxu0 0.0
    %555 = vmatpush.msra.mxu0 0.0
    %556 = vmatpush.msra.mxu0 0.0
    %557 = vmatpush.msra.mxu0 0.0
    %558 = vmatpush.msra.mxu0 0.0
    %559 = vmatpush.msra.mxu0 %v540
    %560 = vmatpush.msra.mxu0 %v539
    %561 = vmatpush.msra.mxu0 %v538
    %562 = vmatpush.msra.mxu0 %v537
    %563 = vmatmul.f32.gmra.mxu0 %v545
    %v564 = vpop.f32.mrf.mxu0
    %v565 = vadd.f32 %v543, %v564
    %566 = vdwg.mxu0
    %567 = vst [vmem:[%s4] sm:$0xff] %v565
  $region25: #{lstm_classifier.3} parent=0 // pred_fallthru
    _
  // Predicated region
  $region26: #{lstm_classifier.3} parent=0 // pred_check
    _
  $region27: #{lstm_classifier.3} parent=0 // pred_check_branch
    %569 = sbr.rel (0) target = $region29
  $region28: #{lstm_classifier.3} parent=0 // pred_region
    _
  $region29: #{lstm_classifier.3} parent=0 // pred_fallthru
    _
  // Predicated region
  $region30: #{lstm_classifier.3} parent=0 // pred_check
    _
  $region31: #{lstm_classifier.3} parent=0 // pred_check_branch
    %571 = sbr.rel (0) target = $region33
  $region32: #{lstm_classifier.3} parent=0 // pred_region
    _
  $region33: #{lstm_classifier.3} parent=0 // pred_fallthru
    _

</llo_original>
